<compile_context>
chip_gen: v7x
topology: tpu7x:2x2x1
jax: 0.10.0
libtpu: 0.0.40
codegen_flags: <defaults>
</compile_context>

<pallas_src>
import functools

import jax
import jax.numpy as jnp
from jax.experimental import pallas as pl
from jax.experimental.pallas import tpu as pltpu


def _round_up(n, m):
    return ((n + m - 1) // m) * m


def _mlp_kernel(x_ref, w1_ref, b1_ref, w2_ref, b2_ref, w3_ref, b3_ref, o_ref):
    # Whole 3-layer MLP for one batch tile, fused in VMEM.
    # Batch-on-lanes layout: x is (S_pad, tb), activations are (H_pad, tb),
    # output is (O_pad, tb).  Biases are (feat, 1) columns broadcast over lanes.
    x = x_ref[...]                                                # (S_pad, tb)
    h1 = jnp.tanh(
        jnp.dot(w1_ref[...], x, preferred_element_type=jnp.float32)
        + b1_ref[...]                                             # (H_pad, 1)
    )
    h2 = jnp.tanh(
        jnp.dot(w2_ref[...], h1, preferred_element_type=jnp.float32)
        + b2_ref[...]
    )
    out = (
        jnp.dot(w3_ref[...], h2, preferred_element_type=jnp.float32)
        + b3_ref[...]                                             # (O_pad, 1)
    )
    o_ref[...] = out.astype(o_ref.dtype)


def bose_hubbard_forward(x, padded_params, *, out_features=2, batch_tile=None):
    """x: (B, num_sites) float32.  padded_params: dict of padded torch-layout
    (out, in) weights and (out, 1) biases.  Returns (B, out_features)."""
    B, S = x.shape
    w1, b1 = padded_params["w1"], padded_params["b1"]
    w2, b2 = padded_params["w2"], padded_params["b2"]
    w3, b3 = padded_params["w3"], padded_params["b3"]
    H_pad, S_pad = w1.shape
    O_pad = w3.shape[0]
    assert S <= S_pad and out_features <= O_pad

    # Batch tile lives on the lane axis -> multiple of 128.  512-2048 is the
    # sweet spot for pipelining; clamp for small demo batches.
    tb = batch_tile or min(1024, _round_up(B, 128))
    assert tb % 128 == 0
    B_pad = _round_up(B, tb)

    # Layout plumbing in the wrapper: transpose to (S, B) and zero-pad.
    x_t = jnp.zeros((S_pad, B_pad), jnp.float32)
    x_t = x_t.at[:S, :B].set(x.T.astype(jnp.float32))

    grid = (B_pad // tb,)
    full = lambda i: (0, 0)     # weights/biases: same full block every step

    n_weight_elems = (w1.size + b1.size + w2.size + b2.size + w3.size + b3.size)
    cost = pl.CostEstimate(
        flops=2 * B_pad * (S_pad * H_pad + H_pad * H_pad + H_pad * O_pad),
        transcendentals=2 * B_pad * H_pad,
        bytes_accessed=4 * (S_pad * B_pad + O_pad * B_pad + n_weight_elems),
    )

    out_t = pl.pallas_call(
        _mlp_kernel,
        out_shape=jax.ShapeDtypeStruct((O_pad, B_pad), jnp.float32),
        grid_spec=pltpu.PrefetchScalarGridSpec(
            num_scalar_prefetch=0,
            grid=grid,
            in_specs=[
                pl.BlockSpec((S_pad, tb), lambda i: (0, i)),      # x tile
                pl.BlockSpec((H_pad, S_pad), full),               # W1 (out,in)
                pl.BlockSpec((H_pad, 1), full),                   # b1
                pl.BlockSpec((H_pad, H_pad), full),               # W2
                pl.BlockSpec((H_pad, 1), full),                   # b2
                pl.BlockSpec((O_pad, H_pad), full),               # W3
                pl.BlockSpec((O_pad, 1), full),                   # b3
            ],
            out_specs=pl.BlockSpec((O_pad, tb), lambda i: (0, i)),
        ),
        compiler_params=pltpu.CompilerParams(
            dimension_semantics=("parallel",),
        ),
        cost_estimate=cost,
    )(x_t, w1, b1, w2, b2, w3, b3)

    # Back to the PyTorch (B, 2) convention; strip padding.
    return out_t[:out_features, :B].T


def init_params(key, num_sites, num_hidden=20, num_out=2):
    """torch.nn.Linear-style init: uniform ±1/sqrt(fan_in), weight (out, in),
    bias (out,).  Unpadded — use pad_params() before handing to the kernel."""
    ks = jax.random.split(key, 6)

    def linear(kw, kb, fan_in, fan_out):
        bound = 1.0 / jnp.sqrt(fan_in)
        w = jax.random.uniform(kw, (fan_out, fan_in), jnp.float32, -bound, bound)
        b = jax.random.uniform(kb, (fan_out,), jnp.float32, -bound, bound)
        return w, b

    w1, b1 = linear(ks[0], ks[1], num_sites, num_hidden)
    w2, b2 = linear(ks[2], ks[3], num_hidden, num_hidden)
    w3, b3 = linear(ks[4], ks[5], num_hidden, num_out)
    return {"w1": w1, "b1": b1, "w2": w2, "b2": b2, "w3": w3, "b3": b3}


def pad_params(params):
    """Zero-pad feature dims up to multiples of 8 (sublane axis in the
    batch-on-lanes layout) and reshape biases to (out, 1) columns."""
    H, S = params["w1"].shape
    O = params["w3"].shape[0]
    S_pad, H_pad, O_pad = _round_up(S, 8), _round_up(H, 8), _round_up(O, 8)

    def pad_w(w, r, c):
        out = jnp.zeros((r, c), jnp.float32)
        return out.at[: w.shape[0], : w.shape[1]].set(w)

    def pad_b(b, r):
        out = jnp.zeros((r, 1), jnp.float32)
        return out.at[: b.shape[0], 0].set(b)

    return {
        "w1": pad_w(params["w1"], H_pad, S_pad), "b1": pad_b(params["b1"], H_pad),
        "w2": pad_w(params["w2"], H_pad, H_pad), "b2": pad_b(params["b2"], H_pad),
        "w3": pad_w(params["w3"], O_pad, H_pad), "b3": pad_b(params["b3"], O_pad),
    }


def reference_forward(x, p):
    h1 = jnp.tanh(x @ p["w1"].T + p["b1"])
    h2 = jnp.tanh(h1 @ p["w2"].T + p["b2"])
    return h2 @ p["w3"].T + p["b3"]


def psi(x, padded_params):
    """ψ(n) = exp(out_1 + i*out_2) — thin complex glue on top of the kernel."""
    out = bose_hubbard_forward(x, padded_params)
    return jnp.exp(out[:, 0] + 1j * out[:, 1])


if __name__ == "__main__":
    key = jax.random.PRNGKey(0)
    num_sites = 8
    num_hidden = 20   # module default; padded to 24 internally
    batch = 8

    kx, kp = jax.random.split(key)
    # occupation-number-like inputs (small non-negative integers, as floats)
    x = jax.random.randint(kx, (batch, num_sites), 0, 4).astype(jnp.float32)
    params = init_params(kp, num_sites, num_hidden)
    padded = pad_params(params)

    out = bose_hubbard_forward(x, padded)
    out = jax.block_until_ready(out)

    ref = reference_forward(x, params)
    assert out.shape == (batch, 2)
    assert jnp.allclose(out, ref, atol=2e-5, rtol=1e-5), "mismatch vs reference"

    wave = jax.block_until_ready(psi(x, padded))
    assert wave.shape == (batch,)
    ref_wave = jnp.exp(ref[:, 0] + 1j * ref[:, 1])
    assert jnp.allclose(wave, ref_wave, atol=1e-4, rtol=1e-4)

    print("KERNEL_OK")
</pallas_src>

<mosaic_0001>
module attributes {stable_mosaic.version = 11 : i64} {
  func.func @_mlp_kernel(%arg0: i32, %arg1: memref<8x128xf32, #tpu.memory_space<vmem>>, %arg2: memref<24x8xf32, #tpu.memory_space<vmem>>, %arg3: memref<24x1xf32, #tpu.memory_space<vmem>>, %arg4: memref<24x24xf32, #tpu.memory_space<vmem>>, %arg5: memref<24x1xf32, #tpu.memory_space<vmem>>, %arg6: memref<8x24xf32, #tpu.memory_space<vmem>>, %arg7: memref<8x1xf32, #tpu.memory_space<vmem>>, %arg8: memref<8x128xf32, #tpu.memory_space<vmem>>) attributes {dimension_semantics = [#tpu.dimension_semantics<parallel>], iteration_bounds = array<i64: 1>, scalar_prefetch = 0 : i64, scratch_operands = 0 : i64, tpu.core_type = #tpu.core_type<tc>, window_params = [{transform_indices = @transform_0, window_bounds = array<i64: 8, 128>}, {pipeline_mode = #tpu.pipeline_mode<synchronous>, transform_indices = @transform_1, window_bounds = array<i64: 24, 8>}, {pipeline_mode = #tpu.pipeline_mode<synchronous>, transform_indices = @transform_2, window_bounds = array<i64: 24, 1>}, {pipeline_mode = #tpu.pipeline_mode<synchronous>, transform_indices = @transform_3, window_bounds = array<i64: 24, 24>}, {pipeline_mode = #tpu.pipeline_mode<synchronous>, transform_indices = @transform_4, window_bounds = array<i64: 24, 1>}, {pipeline_mode = #tpu.pipeline_mode<synchronous>, transform_indices = @transform_5, window_bounds = array<i64: 8, 24>}, {pipeline_mode = #tpu.pipeline_mode<synchronous>, transform_indices = @transform_6, window_bounds = array<i64: 8, 1>}, {transform_indices = @transform_7, window_bounds = array<i64: 8, 128>}]} {
    %c0 = arith.constant 0 : index
    %c0_0 = arith.constant 0 : index
    %0 = vector.load %arg1[%c0, %c0_0] : memref<8x128xf32, #tpu.memory_space<vmem>>, vector<8x128xf32>
    %c0_1 = arith.constant 0 : index
    %c0_2 = arith.constant 0 : index
    %1 = vector.load %arg2[%c0_1, %c0_2] : memref<24x8xf32, #tpu.memory_space<vmem>>, vector<24x8xf32>
    %cst = arith.constant dense<0.000000e+00> : vector<24x128xf32>
    %2 = tpu.matmul %1, %0, %cst {dimension_numbers = #tpu.dot_dimension_numbers<[1], [0], [0], [1], [0, 0, 1, 1], [], []>} : vector<24x8xf32>, vector<8x128xf32>, vector<24x128xf32> -> vector<24x128xf32>
    %c0_3 = arith.constant 0 : index
    %c0_4 = arith.constant 0 : index
    %3 = vector.load %arg3[%c0_3, %c0_4] : memref<24x1xf32, #tpu.memory_space<vmem>>, vector<24x1xf32>
    %4 = vector.broadcast %3 : vector<24x1xf32> to vector<24x128xf32>
    %5 = arith.addf %2, %4 : vector<24x128xf32>
    %6 = math.tanh %5 : vector<24x128xf32>
    %c0_5 = arith.constant 0 : index
    %c0_6 = arith.constant 0 : index
    %7 = vector.load %arg4[%c0_5, %c0_6] : memref<24x24xf32, #tpu.memory_space<vmem>>, vector<24x24xf32>
    %cst_7 = arith.constant dense<0.000000e+00> : vector<24x128xf32>
    %8 = tpu.matmul %7, %6, %cst_7 {dimension_numbers = #tpu.dot_dimension_numbers<[1], [0], [0], [1], [0, 0, 1, 1], [], []>} : vector<24x24xf32>, vector<24x128xf32>, vector<24x128xf32> -> vector<24x128xf32>
    %c0_8 = arith.constant 0 : index
    %c0_9 = arith.constant 0 : index
    %9 = vector.load %arg5[%c0_8, %c0_9] : memref<24x1xf32, #tpu.memory_space<vmem>>, vector<24x1xf32>
    %10 = vector.broadcast %9 : vector<24x1xf32> to vector<24x128xf32>
    %11 = arith.addf %8, %10 : vector<24x128xf32>
    %12 = math.tanh %11 : vector<24x128xf32>
    %c0_10 = arith.constant 0 : index
    %c0_11 = arith.constant 0 : index
    %13 = vector.load %arg6[%c0_10, %c0_11] : memref<8x24xf32, #tpu.memory_space<vmem>>, vector<8x24xf32>
    %cst_12 = arith.constant dense<0.000000e+00> : vector<8x128xf32>
    %14 = tpu.matmul %13, %12, %cst_12 {dimension_numbers = #tpu.dot_dimension_numbers<[1], [0], [0], [1], [0, 0, 1, 1], [], []>} : vector<8x24xf32>, vector<24x128xf32>, vector<8x128xf32> -> vector<8x128xf32>
    %c0_13 = arith.constant 0 : index
    %c0_14 = arith.constant 0 : index
    %15 = vector.load %arg7[%c0_13, %c0_14] : memref<8x1xf32, #tpu.memory_space<vmem>>, vector<8x1xf32>
    %16 = vector.broadcast %15 : vector<8x1xf32> to vector<8x128xf32>
    %17 = arith.addf %14, %16 : vector<8x128xf32>
    %c0_15 = arith.constant 0 : index
    %c0_16 = arith.constant 0 : index
    %18 = vector.load %arg8[%c0_15, %c0_16] : memref<8x128xf32, #tpu.memory_space<vmem>>, vector<8x128xf32>
    tpu.vector_store %arg8[%c0_15, %c0_16], %17 {strides = array<i32>} : memref<8x128xf32, #tpu.memory_space<vmem>>, vector<8x128xf32>,
    return
  }
  func.func @transform_0(%arg0: i32) -> (i32, i32) {
    %c0_i32 = arith.constant 0 : i32
    %c0_i32_0 = arith.constant 0 : i32
    return %c0_i32, %arg0 : i32, i32
  }
  func.func @transform_1(%arg0: i32) -> (i32, i32) {
    %c0_i32 = arith.constant 0 : i32
    %c0_i32_0 = arith.constant 0 : i32
    %c0_i32_1 = arith.constant 0 : i32
    return %c0_i32, %c0_i32_0 : i32, i32
  }
  func.func @transform_2(%arg0: i32) -> (i32, i32) {
    %c0_i32 = arith.constant 0 : i32
    %c0_i32_0 = arith.constant 0 : i32
    %c0_i32_1 = arith.constant 0 : i32
    return %c0_i32, %c0_i32_0 : i32, i32
  }
  func.func @transform_3(%arg0: i32) -> (i32, i32) {
    %c0_i32 = arith.constant 0 : i32
    %c0_i32_0 = arith.constant 0 : i32
    %c0_i32_1 = arith.constant 0 : i32
    return %c0_i32, %c0_i32_0 : i32, i32
  }
  func.func @transform_4(%arg0: i32) -> (i32, i32) {
    %c0_i32 = arith.constant 0 : i32
    %c0_i32_0 = arith.constant 0 : i32
    %c0_i32_1 = arith.constant 0 : i32
    return %c0_i32, %c0_i32_0 : i32, i32
  }
  func.func @transform_5(%arg0: i32) -> (i32, i32) {
    %c0_i32 = arith.constant 0 : i32
    %c0_i32_0 = arith.constant 0 : i32
    %c0_i32_1 = arith.constant 0 : i32
    return %c0_i32, %c0_i32_0 : i32, i32
  }
  func.func @transform_6(%arg0: i32) -> (i32, i32) {
    %c0_i32 = arith.constant 0 : i32
    %c0_i32_0 = arith.constant 0 : i32
    %c0_i32_1 = arith.constant 0 : i32
    return %c0_i32, %c0_i32_0 : i32, i32
  }
  func.func @transform_7(%arg0: i32) -> (i32, i32) {
    %c0_i32 = arith.constant 0 : i32
    %c0_i32_0 = arith.constant 0 : i32
    return %c0_i32, %arg0 : i32, i32
  }
}

</mosaic_0001>

<llo_original>
// kernel: tpu_custom_call.1
$region0: #{tpu_custom_call.1}
  #allocation0 [shape = 'u32[]', space=smem, size = 0x4, offset = 0x4, fixed_abs, tag = 'smem constant byte address 0x4 - core index']
  #allocation1 [shape = 'u32[144,128]{1,0:T(1,128)}', space=vmem, size = 0x12000, scoped, tag = 'internal scratch']
  %s0 = inlined_call_operand.vmem [shape: f32[8,128], index: 0, kind: input, shape index: {}]
  %s1 = inlined_call_operand.vmem [shape: f32[24,8], index: 1, kind: input, shape index: {}]
  %s2 = inlined_call_operand.vmem [shape: f32[24,1], index: 2, kind: input, shape index: {}]
  %s3 = inlined_call_operand.vmem [shape: f32[24,24], index: 3, kind: input, shape index: {}]
  %s4 = inlined_call_operand.vmem [shape: f32[24,1], index: 4, kind: input, shape index: {}]
  %s5 = inlined_call_operand.vmem [shape: f32[8,24], index: 5, kind: input, shape index: {}]
  %s6 = inlined_call_operand.vmem [shape: f32[8,1], index: 6, kind: input, shape index: {}]
  %s7 = inlined_call_operand.hbm [shape: f32[8,128], index: 7, kind: output, shape index: {}]
  %s8 = sld [smem:[#allocation0]]
  $region38: #{tpu_custom_call.1} parent=0
    _
  %s10 = ssub.s32 1, %s8
  %s11 = scalar_select 0, %s10, %s8
  $region1: #{tpu_custom_call.1} parent=0
    #allocation2 [shape = 'u8[4096]{0}', space=vmem, size = 0x1000, scoped, tag = 'output window, operand 0, single buffered']
    #allocation3 [shape = 's32[1]{0}', space=sflag, size = 0x4, scoped, tag = 'scoped memory for tpu_custom_call.1']
    %12 = vsyncpa [#allocation3], 0
    // Predicated region
    $region2: #{tpu_custom_call.1} parent=1 // pred_check
      _
    $region3: #{tpu_custom_call.1} parent=1 // pred_check_branch
      %14 = sbr.rel (0) target = $region5
    $region4: #{tpu_custom_call.1} parent=1 // pred_region
      _
    $region5: #{tpu_custom_call.1} parent=1 // pred_fallthru
      _
    // Predicated region
    $region6: #{tpu_custom_call.1} parent=1 // pred_check
      _
    $region7: #{tpu_custom_call.1} parent=1 // pred_check_branch
      %16 = sbr.rel (0) target = $region9
    $region8: #{tpu_custom_call.1} parent=1 // pred_region
      _
    $region9: #{tpu_custom_call.1} parent=1 // pred_fallthru
      _
    // Predicated region
    $region10: #{tpu_custom_call.1} parent=1 // pred_check
      _
    $region11: #{tpu_custom_call.1} parent=1 // pred_check_branch
      %18 = sbr.rel (0) target = $region13
    $region12: #{tpu_custom_call.1} parent=1 // pred_region
      _
    $region13: #{tpu_custom_call.1} parent=1 // pred_fallthru
      _
    // Predicated region
    $region14: #{tpu_custom_call.1} parent=1 // pred_check
      _
    $region15: #{tpu_custom_call.1} parent=1 // pred_check_branch
      %20 = sbr.rel (0) target = $region17
    $region16: #{tpu_custom_call.1} parent=1 // pred_region
      _
    $region17: #{tpu_custom_call.1} parent=1 // pred_fallthru
      _
    // Predicated region
    $region18: #{tpu_custom_call.1} parent=1 // pred_check
      _
    $region19: #{tpu_custom_call.1} parent=1 // pred_check_branch
      %22 = sbr.rel (0) target = $region21
    $region20: #{tpu_custom_call.1} parent=1 // pred_region
      _
    $region21: #{tpu_custom_call.1} parent=1 // pred_fallthru
      _
    // Predicated region
    $region22: #{tpu_custom_call.1} parent=1 // pred_check
      _
    $region23: #{tpu_custom_call.1} parent=1 // pred_check_branch
      %24 = sbr.rel (0) target = $region25
    $region24: #{tpu_custom_call.1} parent=1 // pred_region
      _
    $region25: #{tpu_custom_call.1} parent=1 // pred_fallthru
      _
    // Predicated region
    $region26: #{tpu_custom_call.1} parent=1 // pred_check
      _
    $region27: #{tpu_custom_call.1} parent=1 // pred_check_branch
      %26 = sbr.rel (0) target = $region29
    $region28: #{tpu_custom_call.1} parent=1 // pred_region
      _
    $region29: #{tpu_custom_call.1} parent=1 // pred_fallthru
      _
    %v27 = vld [vmem:[%s0] sm:$0xff]
    %v28 = vld [vmem:[%s1] sm:$0xff]
    %v29 = vld [vmem:[%s1 + $0x8] sm:$0xff]
    %v30 = vld [vmem:[%s1 + $0x10] sm:$0xff]
    %v31 = vld [vmem:[%s2] sm:$0xff]
    %v32 = vld [vmem:[%s2 + $0x8] sm:$0xff]
    %v33 = vld [vmem:[%s2 + $0x10] sm:$0xff]
    %35 = vset.pattern.permute.xlu0 0
    %36 = vperm.xlu0 %35, %v31
    %v37 = vpop.permute.xlu0 %36
    %40 = vset.pattern.permute.xlu0 0
    %41 = vperm.xlu0 %40, %v32
    %v42 = vpop.permute.xlu0 %41
    %45 = vset.pattern.permute.xlu0 0
    %46 = vperm.xlu0 %45, %v33
    %v47 = vpop.permute.xlu0 %46
    %vm49 = vcmask 64512
    %v51 = vsel %vm49, %v28, 0
    %v54 = vsel %vm49, %v29, 0
    %v57 = vsel %vm49, %v30, 0
    %59 = vmatprep.subr.mxu0 0.0
    %60 = vmatpush1.msra.mxu0 %v27
    %61 = vmatprep.subr.mxu0 0.0
    %62 = vmatpush1.msra.mxu0 0.0
    %63 = vmatprep.subr.mxu0 0.0
    %64 = vmatpush1.msra.mxu0 0.0
    %65 = vmatprep.subr.mxu0 0.0
    %66 = vmatpush1.msra.mxu0 0.0
    %67 = vmatprep.subr.mxu0 0.0
    %68 = vmatpush1.msra.mxu0 0.0
    %69 = vmatprep.subr.mxu0 0.0
    %70 = vmatpush1.msra.mxu0 0.0
    %71 = vmatprep.subr.mxu0 0.0
    %72 = vmatpush1.msra.mxu0 0.0
    %73 = vmatprep.subr.mxu0 0.0
    %74 = vmatpush1.msra.mxu0 0.0
    %75 = vmatprep.subr.mxu0 0.0
    %76 = vmatpush1.msra.mxu0 0.0
    %77 = vmatprep.subr.mxu0 0.0
    %78 = vmatpush1.msra.mxu0 0.0
    %79 = vmatprep.subr.mxu0 0.0
    %80 = vmatpush1.msra.mxu0 0.0
    %81 = vmatprep.subr.mxu0 0.0
    %82 = vmatpush1.msra.mxu0 0.0
    %83 = vmatprep.subr.mxu0 0.0
    %84 = vmatpush1.msra.mxu0 0.0
    %85 = vmatprep.subr.mxu0 0.0
    %86 = vmatpush1.msra.mxu0 0.0
    %87 = vmatprep.subr.mxu0 0.0
    %88 = vmatpush1.msra.mxu0 0.0
    %89 = vmatprep.subr.mxu0 0.0
    %90 = vmatpush1.msra.mxu0 0.0
    %91 = vmatprep.subr.mxu0 0.0
    %92 = vmatpush1.msra.mxu0 0.0
    %93 = vmatprep.subr.mxu0 0.0
    %94 = vmatpush1.msra.mxu0 0.0
    %95 = vmatprep.subr.mxu0 0.0
    %96 = vmatpush1.msra.mxu0 0.0
    %97 = vmatprep.subr.mxu0 0.0
    %98 = vmatpush1.msra.mxu0 0.0
    %99 = vmatprep.subr.mxu0 0.0
    %100 = vmatpush1.msra.mxu0 0.0
    %101 = vmatprep.subr.mxu0 0.0
    %102 = vmatpush1.msra.mxu0 0.0
    %103 = vmatprep.subr.mxu0 0.0
    %104 = vmatpush1.msra.mxu0 0.0
    %105 = vmatprep.subr.mxu0 0.0
    %106 = vmatpush1.msra.mxu0 0.0
    %107 = vmatprep.subr.mxu0 0.0
    %108 = vmatpush1.msra.mxu0 0.0
    %109 = vmatprep.subr.mxu0 0.0
    %110 = vmatpush1.msra.mxu0 0.0
    %111 = vmatprep.subr.mxu0 0.0
    %112 = vmatpush1.msra.mxu0 0.0
    %113 = vmatprep.subr.mxu0 0.0
    %114 = vmatpush1.msra.mxu0 0.0
    %115 = vmatprep.subr.mxu0 0.0
    %116 = vmatpush1.msra.mxu0 0.0
    %117 = vmatprep.subr.mxu0 0.0
    %118 = vmatpush1.msra.mxu0 0.0
    %119 = vmatprep.subr.mxu0 0.0
    %120 = vmatpush1.msra.mxu0 0.0
    %121 = vmatprep.subr.mxu0 0.0
    %122 = vmatpush1.msra.mxu0 0.0
    %123 = vmatprep.mubr.f32.mxu0 0.0
    %124 = vmatmul.mubr.f32.gmra.mrb[0].mxu0 %v51
    %v125 = vpop.f32.mrb[0].mxu0
    %v126 = vadd.f32 %v37, %v125
    %v127 = vpop.f32.mrb[0].mxu0
    %128 = vmatprep.mubr.f32.mxu0 0.0
    %129 = vmatmul.mubr.f32.gmra.mrb[0].mxu0 %v54
    %v130 = vpop.f32.mrb[0].mxu0
    %v131 = vadd.f32 %v42, %v130
    %v132 = vpop.f32.mrb[0].mxu0
    %133 = vmatprep.mubr.f32.mxu0 0.0
    %134 = vmatmul.mubr.f32.gmra.mrb[0].mxu0 %v57
    %v135 = vpop.f32.mrb[0].mxu0
    %v136 = vadd.f32 %v47, %v135
    %v137 = vpop.f32.mrb[0].mxu0
    %138 = vdwg.mxu0
    %v139 = vtanh.pop %v126
    %v140 = vtanh.pop %v131
    %v141 = vtanh.pop %v136
    %v142 = vld [vmem:[%s3] sm:$0xff]
    %v143 = vld [vmem:[%s3 + $0x8] sm:$0xff]
    %v144 = vld [vmem:[%s3 + $0x10] sm:$0xff]
    %v145 = vld [vmem:[%s4] sm:$0xff]
    %v146 = vld [vmem:[%s4 + $0x8] sm:$0xff]
    %v147 = vld [vmem:[%s4 + $0x10] sm:$0xff]
    %149 = vset.pattern.permute.xlu0 0
    %150 = vperm.xlu0 %149, %v145
    %v151 = vpop.permute.xlu0 %150
    %154 = vset.pattern.permute.xlu0 0
    %155 = vperm.xlu0 %154, %v146
    %v156 = vpop.permute.xlu0 %155
    %159 = vset.pattern.permute.xlu0 0
    %160 = vperm.xlu0 %159, %v147
    %v161 = vpop.permute.xlu0 %160
    %vm163 = vcmask 195584
    %v165 = vsel %vm163, %v142, 0
    %v168 = vsel %vm163, %v143, 0
    %v171 = vsel %vm163, %v144, 0
    %173 = vmatprep.subr.mxu0 0.0
    %174 = vmatpush1.msra.mxu0 %v139
    %175 = vmatprep.subr.mxu0 0.0
    %176 = vmatpush1.msra.mxu0 %v140
    %177 = vmatprep.subr.mxu0 0.0
    %178 = vmatpush1.msra.mxu0 %v141
    %179 = vmatprep.subr.mxu0 0.0
    %180 = vmatpush1.msra.mxu0 0.0
    %181 = vmatprep.subr.mxu0 0.0
    %182 = vmatpush1.msra.mxu0 0.0
    %183 = vmatprep.subr.mxu0 0.0
    %184 = vmatpush1.msra.mxu0 0.0
    %185 = vmatprep.subr.mxu0 0.0
    %186 = vmatpush1.msra.mxu0 0.0
    %187 = vmatprep.subr.mxu0 0.0
    %188 = vmatpush1.msra.mxu0 0.0
    %189 = vmatprep.subr.mxu0 0.0
    %190 = vmatpush1.msra.mxu0 0.0
    %191 = vmatprep.subr.mxu0 0.0
    %192 = vmatpush1.msra.mxu0 0.0
    %193 = vmatprep.subr.mxu0 0.0
    %194 = vmatpush1.msra.mxu0 0.0
    %195 = vmatprep.subr.mxu0 0.0
    %196 = vmatpush1.msra.mxu0 0.0
    %197 = vmatprep.subr.mxu0 0.0
    %198 = vmatpush1.msra.mxu0 0.0
    %199 = vmatprep.subr.mxu0 0.0
    %200 = vmatpush1.msra.mxu0 0.0
    %201 = vmatprep.subr.mxu0 0.0
    %202 = vmatpush1.msra.mxu0 0.0
    %203 = vmatprep.subr.mxu0 0.0
    %204 = vmatpush1.msra.mxu0 0.0
    %205 = vmatprep.subr.mxu0 0.0
    %206 = vmatpush1.msra.mxu0 0.0
    %207 = vmatprep.subr.mxu0 0.0
    %208 = vmatpush1.msra.mxu0 0.0
    %209 = vmatprep.subr.mxu0 0.0
    %210 = vmatpush1.msra.mxu0 0.0
    %211 = vmatprep.subr.mxu0 0.0
    %212 = vmatpush1.msra.mxu0 0.0
    %213 = vmatprep.subr.mxu0 0.0
    %214 = vmatpush1.msra.mxu0 0.0
    %215 = vmatprep.subr.mxu0 0.0
    %216 = vmatpush1.msra.mxu0 0.0
    %217 = vmatprep.subr.mxu0 0.0
    %218 = vmatpush1.msra.mxu0 0.0
    %219 = vmatprep.subr.mxu0 0.0
    %220 = vmatpush1.msra.mxu0 0.0
    %221 = vmatprep.subr.mxu0 0.0
    %222 = vmatpush1.msra.mxu0 0.0
    %223 = vmatprep.subr.mxu0 0.0
    %224 = vmatpush1.msra.mxu0 0.0
    %225 = vmatprep.subr.mxu0 0.0
    %226 = vmatpush1.msra.mxu0 0.0
    %227 = vmatprep.subr.mxu0 0.0
    %228 = vmatpush1.msra.mxu0 0.0
    %229 = vmatprep.subr.mxu0 0.0
    %230 = vmatpush1.msra.mxu0 0.0
    %231 = vmatprep.subr.mxu0 0.0
    %232 = vmatpush1.msra.mxu0 0.0
    %233 = vmatprep.subr.mxu0 0.0
    %234 = vmatpush1.msra.mxu0 0.0
    %235 = vmatprep.subr.mxu0 0.0
    %236 = vmatpush1.msra.mxu0 0.0
    %237 = vmatprep.mubr.f32.mxu0 0.0
    %238 = vmatmul.mubr.f32.gmra.mrb[0].mxu0 %v165
    %v239 = vpop.f32.mrb[0].mxu0
    %v240 = vadd.f32 %v151, %v239
    %v241 = vpop.f32.mrb[0].mxu0
    %242 = vmatprep.mubr.f32.mxu0 0.0
    %243 = vmatmul.mubr.f32.gmra.mrb[0].mxu0 %v168
    %v244 = vpop.f32.mrb[0].mxu0
    %v245 = vadd.f32 %v156, %v244
    %v246 = vpop.f32.mrb[0].mxu0
    %247 = vmatprep.mubr.f32.mxu0 0.0
    %248 = vmatmul.mubr.f32.gmra.mrb[0].mxu0 %v171
    %v249 = vpop.f32.mrb[0].mxu0
    %v250 = vadd.f32 %v161, %v249
    %v251 = vpop.f32.mrb[0].mxu0
    %252 = vdwg.mxu0
    %v253 = vtanh.pop %v240
    %v254 = vtanh.pop %v245
    %v255 = vtanh.pop %v250
    %v256 = vld [vmem:[%s5] sm:$0xff]
    %v257 = vld [vmem:[%s6] sm:$0xff]
    %259 = vset.pattern.permute.xlu0 0
    %260 = vperm.xlu0 %259, %v257
    %v261 = vpop.permute.xlu0 %260
    %v264 = vsel %vm163, %v256, 0
    %266 = vmatprep.subr.mxu0 0.0
    %267 = vmatpush1.msra.mxu0 %v253
    %268 = vmatprep.subr.mxu0 0.0
    %269 = vmatpush1.msra.mxu0 %v254
    %270 = vmatprep.subr.mxu0 0.0
    %271 = vmatpush1.msra.mxu0 %v255
    %272 = vmatprep.subr.mxu0 0.0
    %273 = vmatpush1.msra.mxu0 0.0
    %274 = vmatprep.subr.mxu0 0.0
    %275 = vmatpush1.msra.mxu0 0.0
    %276 = vmatprep.subr.mxu0 0.0
    %277 = vmatpush1.msra.mxu0 0.0
    %278 = vmatprep.subr.mxu0 0.0
    %279 = vmatpush1.msra.mxu0 0.0
    %280 = vmatprep.subr.mxu0 0.0
    %281 = vmatpush1.msra.mxu0 0.0
    %282 = vmatprep.subr.mxu0 0.0
    %283 = vmatpush1.msra.mxu0 0.0
    %284 = vmatprep.subr.mxu0 0.0
    %285 = vmatpush1.msra.mxu0 0.0
    %286 = vmatprep.subr.mxu0 0.0
    %287 = vmatpush1.msra.mxu0 0.0
    %288 = vmatprep.subr.mxu0 0.0
    %289 = vmatpush1.msra.mxu0 0.0
    %290 = vmatprep.subr.mxu0 0.0
    %291 = vmatpush1.msra.mxu0 0.0
    %292 = vmatprep.subr.mxu0 0.0
    %293 = vmatpush1.msra.mxu0 0.0
    %294 = vmatprep.subr.mxu0 0.0
    %295 = vmatpush1.msra.mxu0 0.0
    %296 = vmatprep.subr.mxu0 0.0
    %297 = vmatpush1.msra.mxu0 0.0
    %298 = vmatprep.subr.mxu0 0.0
    %299 = vmatpush1.msra.mxu0 0.0
    %300 = vmatprep.subr.mxu0 0.0
    %301 = vmatpush1.msra.mxu0 0.0
    %302 = vmatprep.subr.mxu0 0.0
    %303 = vmatpush1.msra.mxu0 0.0
    %304 = vmatprep.subr.mxu0 0.0
    %305 = vmatpush1.msra.mxu0 0.0
    %306 = vmatprep.subr.mxu0 0.0
    %307 = vmatpush1.msra.mxu0 0.0
    %308 = vmatprep.subr.mxu0 0.0
    %309 = vmatpush1.msra.mxu0 0.0
    %310 = vmatprep.subr.mxu0 0.0
    %311 = vmatpush1.msra.mxu0 0.0
    %312 = vmatprep.subr.mxu0 0.0
    %313 = vmatpush1.msra.mxu0 0.0
    %314 = vmatprep.subr.mxu0 0.0
    %315 = vmatpush1.msra.mxu0 0.0
    %316 = vmatprep.subr.mxu0 0.0
    %317 = vmatpush1.msra.mxu0 0.0
    %318 = vmatprep.subr.mxu0 0.0
    %319 = vmatpush1.msra.mxu0 0.0
    %320 = vmatprep.subr.mxu0 0.0
    %321 = vmatpush1.msra.mxu0 0.0
    %322 = vmatprep.subr.mxu0 0.0
    %323 = vmatpush1.msra.mxu0 0.0
    %324 = vmatprep.subr.mxu0 0.0
    %325 = vmatpush1.msra.mxu0 0.0
    %326 = vmatprep.subr.mxu0 0.0
    %327 = vmatpush1.msra.mxu0 0.0
    %328 = vmatprep.subr.mxu0 0.0
    %329 = vmatpush1.msra.mxu0 0.0
    %330 = vmatprep.mubr.f32.mxu0 0.0
    %331 = vmatmul.mubr.f32.gmra.mrb[0].mxu0 %v264
    %v332 = vpop.f32.mrb[0].mxu0
    %v333 = vadd.f32 %v261, %v332
    %v334 = vpop.f32.mrb[0].mxu0
    %335 = vdwg.mxu0
    %336 = vst [vmem:[#allocation2] sm:$0xff] %v333
    // Predicated region
    $region30: #{tpu_custom_call.1} parent=1 // pred_check
      _
    $region31: #{tpu_custom_call.1} parent=1 // pred_check_branch
      %338 = sbr.rel (0) target = $region33
    $region32: #{tpu_custom_call.1} parent=1 // pred_region
      %s340 = ssub.s32 128, 128
      %341 = vsyncadd [#allocation3], %s340
      %s343 = sshll.u32 [#allocation2], 4
      %s344 = int_to_ptr.vmem [resolvable:$true] %s343
      %346 = dma.vmem_to_hbm [thread:$0]  %s344, 128, %s7, [#allocation3]
    $region33: #{tpu_custom_call.1} parent=1 // pred_fallthru
      _
    // Predicated region
    $region34: #{tpu_custom_call.1} parent=1 // pred_check
      _
    $region35: #{tpu_custom_call.1} parent=1 // pred_check_branch
      %348 = sbr.rel (0) target = $region37
    $region36: #{tpu_custom_call.1} parent=1 // pred_region
      %349 = dma.done [#allocation3], 128
    $region37: #{tpu_custom_call.1} parent=1 // pred_fallthru
      _
    %350 = vsyncpa [#allocation3], 1

</llo_original>
